<compile_context>
chip_gen: v6e
topology: v6e:2x2x1
jax: 0.10.0
libtpu: 0.0.40
codegen_flags: <defaults>
</compile_context>

<pallas_src>
import functools
import math

import jax
import jax.numpy as jnp
from jax import lax
from jax.experimental import pallas as pl
from jax.experimental.pallas import tpu as pltpu


def _round_up(x, m):
    return (x + m - 1) // m * m


def _fused_conv_pool_kernel(*refs, ksize, stride, l_conv, do_pool, pool_k,
                            pool_s, pool_p, l_out, has_mask, activation):
    # refs layout: x_ref, w_ref, [m_ref], o_ref, [scratch]
    x_ref = refs[0]                      # (S_pad, E)      compute dtype (bf16)
    w_ref = refs[1]                      # (K, E, C_pad)   compute dtype (bf16)
    idx = 2
    m_ref = refs[idx] if has_mask else None
    idx += int(has_mask)
    o_ref = refs[idx]                    # (L_out, C_pad)  float32
    scr = refs[idx + 1] if do_pool else None   # (Ls, C_pad) float32 scratch

    c_pad = o_ref.shape[-1]

    # ---- conv as K shifted matmuls accumulated in f32 (no im2col) -----------
    acc = None
    for k in range(ksize):
        if stride == 1:
            xk = x_ref[pl.ds(k, l_conv), :]                    # (L_conv, E)
        else:
            xk = x_ref[pl.ds(k, l_conv, stride=stride), :]
        part = jnp.dot(xk, w_ref[k], preferred_element_type=jnp.float32)
        acc = part if acc is None else acc + part              # (L_conv, C_pad) f32

    if activation is not None:
        acc = activation(acc)

    if do_pool:
        # ---- fused MaxPool(P, stride=ps, pad=pp) with -inf padding ----------
        ls = scr.shape[0]
        if pool_p > 0:
            scr[pl.ds(0, pool_p), :] = jnp.full((pool_p, c_pad), -jnp.inf,
                                                jnp.float32)
        tail = ls - (pool_p + l_conv)
        scr[pl.ds(pool_p + l_conv, tail), :] = jnp.full((tail, c_pad), -jnp.inf,
                                                        jnp.float32)
        scr[pl.ds(pool_p, l_conv), :] = acc

        def window(p):
            if pool_s == 1:
                return scr[pl.ds(p, l_out), :]
            return scr[pl.ds(p, l_out, stride=pool_s), :]      # sublane-strided load

        pooled = window(0)
        for p in range(1, pool_k):
            pooled = jnp.maximum(pooled, window(p))             # (L_out, C_pad) f32
    else:
        pooled = acc

    if has_mask:
        pooled = pooled * m_ref[...]      # (L_out, 1) broadcast over lanes

    o_ref[...] = pooled.astype(o_ref.dtype)


class TextTokenizerPallas:
    """JAX/Pallas equivalent of the PyTorch TextTokenizer (activation default None)."""

    def __init__(self, kernel_size, stride, padding,
                 pooling_kernel_size=3, pooling_stride=2, pooling_padding=1,
                 embedding_dim=300, n_output_channels=128, activation=None,
                 max_pool=True, compute_dtype=jnp.bfloat16, key=None):
        self.kernel_size = kernel_size
        self.stride = stride
        self.padding = padding
        self.pooling_kernel_size = pooling_kernel_size
        self.pooling_stride = pooling_stride
        self.pooling_padding = pooling_padding
        self.embedding_dim = embedding_dim
        self.n_output_channels = n_output_channels
        self.activation = activation        # optional JAX-traceable elementwise fn
        self.max_pool = max_pool
        self.compute_dtype = compute_dtype

        # Deterministic kaiming_normal_ (fan_in mode, gain sqrt(2)), bias=False.
        fan_in = 1 * kernel_size * embedding_dim
        std = math.sqrt(2.0 / fan_in)
        if key is None:
            key = jax.random.PRNGKey(0)
        # PyTorch Conv2d weight layout: (C_out, C_in=1, K, E).  Kept in fp32.
        self.weight = std * jax.random.normal(
            key, (n_output_channels, 1, kernel_size, embedding_dim),
            dtype=jnp.float32)

        # Packed weight for the kernel: (K, E, C_pad) in compute dtype, C padded to a
        # multiple of 128 so the output tile stays lane-dense (no masked stores).
        self.c_pad = _round_up(n_output_channels, 128)
        w = jnp.transpose(self.weight[:, 0, :, :], (1, 2, 0))   # (K, E, C)
        if self.c_pad != n_output_channels:
            w = jnp.pad(w, ((0, 0), (0, 0), (0, self.c_pad - n_output_channels)))
        self.w_packed = w.astype(compute_dtype)

    # ---- static shape helpers -------------------------------------------
    def _conv_out_len(self, s):
        return (s + 2 * self.padding - self.kernel_size) // self.stride + 1

    def _pool_out_len(self, l):
        return (l + 2 * self.pooling_padding
                - self.pooling_kernel_size) // self.pooling_stride + 1

    def seq_len(self, seq_len=32, embed_dim=300):
        l = self._conv_out_len(seq_len)
        return self._pool_out_len(l) if self.max_pool else l

    # ---- mask path (one reduce_window per stage; matches forward_mask) ---
    def forward_mask(self, mask):
        m = mask.astype(jnp.float32)
        m = lax.reduce_window(
            m, 0.0, lax.add,
            window_dimensions=(1, self.kernel_size),
            window_strides=(1, self.stride),
            padding=((0, 0), (self.padding, self.padding)))
        if self.max_pool:
            m = lax.reduce_window(
                m, -jnp.inf, lax.max,
                window_dimensions=(1, self.pooling_kernel_size),
                window_strides=(1, self.pooling_stride),
                padding=((0, 0), (self.pooling_padding, self.pooling_padding)))
        return m > 0

    # ---- forward ----------------------------------------------------------
    def __call__(self, x, mask=None):
        B, S, E = x.shape
        assert E == self.embedding_dim
        C, C_pad = self.n_output_channels, self.c_pad
        K, st, pad = self.kernel_size, self.stride, self.padding
        P, ps, pp = (self.pooling_kernel_size, self.pooling_stride,
                     self.pooling_padding)
        l_conv = self._conv_out_len(S)
        l_out = self._pool_out_len(l_conv) if self.max_pool else l_conv
        s_pad = S + 2 * pad

        # Conv zero-padding along the sequence + cast to the MXU compute dtype.
        x_c = jnp.pad(x, ((0, 0), (pad, pad), (0, 0))).astype(self.compute_dtype)

        has_mask = mask is not None
        if has_mask:
            m_f = self.forward_mask(mask).astype(jnp.float32)[..., None]  # (B, L_out, 1)

        kernel = functools.partial(
            _fused_conv_pool_kernel, ksize=K, stride=st, l_conv=l_conv,
            do_pool=self.max_pool, pool_k=P, pool_s=ps, pool_p=pp,
            l_out=l_out, has_mask=has_mask, activation=self.activation)

        in_specs = [
            pl.BlockSpec((None, s_pad, E), lambda b: (b, 0, 0)),       # x tile
            pl.BlockSpec((K, E, C_pad), lambda b: (0, 0, 0)),          # resident weight
        ]
        inputs = [x_c, self.w_packed]
        if has_mask:
            in_specs.append(pl.BlockSpec((None, l_out, 1), lambda b: (b, 0, 0)))
            inputs.append(m_f)

        scratch_shapes = []
        if self.max_pool:
            ls = l_conv + 2 * pp + ps      # +ps rows of slack for the strided reads
            scratch_shapes.append(pltpu.VMEM((ls, C_pad), jnp.float32))

        flops = 2 * B * l_conv * K * E * C_pad
        bytes_accessed = int(
            x_c.size * x_c.dtype.itemsize
            + self.w_packed.size * self.w_packed.dtype.itemsize
            + B * l_out * C_pad * 4
            + (B * l_out * 4 if has_mask else 0))

        out = pl.pallas_call(
            kernel,
            grid=(B,),
            in_specs=in_specs,
            out_specs=pl.BlockSpec((None, l_out, C_pad), lambda b: (b, 0, 0)),
            out_shape=jax.ShapeDtypeStruct((B, l_out, C_pad), jnp.float32),
            scratch_shapes=scratch_shapes,
            compiler_params=pltpu.CompilerParams(
                dimension_semantics=("parallel",)),
            cost_estimate=pl.CostEstimate(flops=flops, transcendentals=0,
                                          bytes_accessed=bytes_accessed),
        )(*inputs)

        if C_pad != C:
            out = out[..., :C]
        if has_mask:
            return out, m_f
        return out, None


if __name__ == "__main__":
    key = jax.random.PRNGKey(0)
    kw, kx = jax.random.split(key)

    B, S, E = 2, 8, 32
    kernel_size, stride, padding = 2, 1, 1
    C = 128

    tok = TextTokenizerPallas(kernel_size=kernel_size, stride=stride,
                              padding=padding, embedding_dim=E,
                              n_output_channels=C, key=kw)
    x = jax.random.normal(kx, (B, S, E), dtype=jnp.float32)

    out, _ = tok(x)
    out = jax.block_until_ready(out)

    # Independent reference on the same bf16-quantised inputs (kernel uses bf16 MXU
    # inputs with f32 accumulation): lax conv + reduce_window, then transpose/squeeze.
    x_q = x.astype(jnp.bfloat16).astype(jnp.float32)
    w_q = tok.weight.astype(jnp.bfloat16).astype(jnp.float32)
    ref = lax.conv_general_dilated(
        x_q[:, None, :, :], w_q, window_strides=(stride, 1),
        padding=((padding, padding), (0, 0)),
        dimension_numbers=("NCHW", "OIHW", "NCHW"),
        precision=lax.Precision.HIGHEST)
    ref = lax.reduce_window(
        ref, -jnp.inf, lax.max,
        window_dimensions=(1, 1, 3, 1), window_strides=(1, 1, 2, 1),
        padding=((0, 0), (0, 0), (1, 1), (0, 0)))
    ref = jnp.swapaxes(ref, 1, 3)[:, 0]          # (B, L_pool, C)

    assert out.shape == ref.shape, (out.shape, ref.shape)
    max_err = float(jnp.max(jnp.abs(out - ref)))
    assert jnp.allclose(out, ref, rtol=1e-2, atol=1e-2), max_err

    # Mask path (mask multiply fused into the kernel epilogue).
    mask = jnp.arange(S)[None, :] < jnp.array([[6], [8]])
    out_m, m = tok(x, mask)
    out_m = jax.block_until_ready(out_m)
    assert out_m.shape == out.shape and m.shape == (B, out.shape[1], 1)
    assert jnp.allclose(out_m, out * m, rtol=1e-5, atol=1e-5)

    print("KERNEL_OK")
</pallas_src>

<mosaic_0001>
module attributes {stable_mosaic.version = 11 : i64} {
  func.func @_fused_conv_pool_kernel(%arg0: i32, %arg1: memref<1x10x32xbf16, #tpu.memory_space<vmem>>, %arg2: memref<2x32x128xbf16, #tpu.memory_space<vmem>>, %arg3: memref<1x5x128xf32, #tpu.memory_space<vmem>>, %arg4: memref<13x128xf32, #tpu.memory_space<vmem>>) attributes {dimension_semantics = [#tpu.dimension_semantics<parallel>], iteration_bounds = array<i64: 2>, scalar_prefetch = 0 : i64, scratch_operands = 1 : i64, tpu.core_type = #tpu.core_type<tc>, window_params = [{transform_indices = @transform_0, window_bounds = array<i64: 1, 10, 32>}, {pipeline_mode = #tpu.pipeline_mode<synchronous>, transform_indices = @transform_1, window_bounds = array<i64: 2, 32, 128>}, {transform_indices = @transform_2, window_bounds = array<i64: 1, 5, 128>}]} {
    %c0 = arith.constant 0 : index
    %c0_0 = arith.constant 0 : index
    %c0_1 = arith.constant 0 : index
    %0 = vector.load %arg1[%c0, %c0_0, %c0_1] : memref<1x10x32xbf16, #tpu.memory_space<vmem>>, vector<1x9x32xbf16>
    %1 = vector.shape_cast %0 : vector<1x9x32xbf16> to vector<9x32xbf16>
    %c0_2 = arith.constant 0 : index
    %c0_3 = arith.constant 0 : index
    %c0_4 = arith.constant 0 : index
    %2 = vector.load %arg2[%c0_2, %c0_3, %c0_4] : memref<2x32x128xbf16, #tpu.memory_space<vmem>>, vector<1x32x128xbf16>
    %3 = vector.shape_cast %2 : vector<1x32x128xbf16> to vector<32x128xbf16>
    %cst = arith.constant dense<0.000000e+00> : vector<9x128xf32>
    %4 = tpu.matmul %1, %3, %cst {dimension_numbers = #tpu.dot_dimension_numbers<[1], [0], [0], [1], [0, 0, 1, 1], [], []>} : vector<9x32xbf16>, vector<32x128xbf16>, vector<9x128xf32> -> vector<9x128xf32>
    %c0_5 = arith.constant 0 : index
    %c1 = arith.constant 1 : index
    %c0_6 = arith.constant 0 : index
    %5 = vector.load %arg1[%c0_5, %c1, %c0_6] : memref<1x10x32xbf16, #tpu.memory_space<vmem>>, vector<1x9x32xbf16>
    %6 = vector.shape_cast %5 : vector<1x9x32xbf16> to vector<9x32xbf16>
    %c1_7 = arith.constant 1 : index
    %c0_8 = arith.constant 0 : index
    %c0_9 = arith.constant 0 : index
    %7 = vector.load %arg2[%c1_7, %c0_8, %c0_9] : memref<2x32x128xbf16, #tpu.memory_space<vmem>>, vector<1x32x128xbf16>
    %8 = vector.shape_cast %7 : vector<1x32x128xbf16> to vector<32x128xbf16>
    %cst_10 = arith.constant dense<0.000000e+00> : vector<9x128xf32>
    %9 = tpu.matmul %6, %8, %cst_10 {dimension_numbers = #tpu.dot_dimension_numbers<[1], [0], [0], [1], [0, 0, 1, 1], [], []>} : vector<9x32xbf16>, vector<32x128xbf16>, vector<9x128xf32> -> vector<9x128xf32>
    %10 = arith.addf %4, %9 : vector<9x128xf32>
    %cst_11 = arith.constant 0xFF800000 : f32
    %11 = vector.broadcast %cst_11 : f32 to vector<1x128xf32>
    %c0_12 = arith.constant 0 : index
    %c0_13 = arith.constant 0 : index
    %12 = vector.load %arg4[%c0_12, %c0_13] : memref<13x128xf32, #tpu.memory_space<vmem>>, vector<1x128xf32>
    tpu.vector_store %arg4[%c0_12, %c0_13], %11 {strides = array<i32>} : memref<13x128xf32, #tpu.memory_space<vmem>>, vector<1x128xf32>,
    %cst_14 = arith.constant 0xFF800000 : f32
    %13 = vector.broadcast %cst_14 : f32 to vector<3x128xf32>
    %c10 = arith.constant 10 : index
    %c0_15 = arith.constant 0 : index
    %14 = vector.load %arg4[%c10, %c0_15] : memref<13x128xf32, #tpu.memory_space<vmem>>, vector<3x128xf32>
    tpu.vector_store %arg4[%c10, %c0_15], %13 {strides = array<i32>} : memref<13x128xf32, #tpu.memory_space<vmem>>, vector<3x128xf32>,
    %c1_16 = arith.constant 1 : index
    %c0_17 = arith.constant 0 : index
    %15 = vector.load %arg4[%c1_16, %c0_17] : memref<13x128xf32, #tpu.memory_space<vmem>>, vector<9x128xf32>
    tpu.vector_store %arg4[%c1_16, %c0_17], %10 {strides = array<i32>} : memref<13x128xf32, #tpu.memory_space<vmem>>, vector<9x128xf32>,
    %c0_18 = arith.constant 0 : index
    %c0_19 = arith.constant 0 : index
    %16 = tpu.strided_load %arg4[%c0_18, %c0_19] {strides = array<i32: 2, 1>} : memref<13x128xf32, #tpu.memory_space<vmem>>, vector<5x128xf32>
    %c1_20 = arith.constant 1 : index
    %c0_21 = arith.constant 0 : index
    %17 = tpu.strided_load %arg4[%c1_20, %c0_21] {strides = array<i32: 2, 1>} : memref<13x128xf32, #tpu.memory_space<vmem>>, vector<5x128xf32>
    %18 = arith.maximumf %16, %17 : vector<5x128xf32>
    %c2 = arith.constant 2 : index
    %c0_22 = arith.constant 0 : index
    %19 = tpu.strided_load %arg4[%c2, %c0_22] {strides = array<i32: 2, 1>} : memref<13x128xf32, #tpu.memory_space<vmem>>, vector<5x128xf32>
    %20 = arith.maximumf %18, %19 : vector<5x128xf32>
    %c0_23 = arith.constant 0 : index
    %c0_24 = arith.constant 0 : index
    %c0_25 = arith.constant 0 : index
    %21 = vector.load %arg3[%c0_23, %c0_24, %c0_25] : memref<1x5x128xf32, #tpu.memory_space<vmem>>, vector<1x5x128xf32>
    %22 = vector.shape_cast %21 : vector<1x5x128xf32> to vector<5x128xf32>
    %23 = vector.shape_cast %20 : vector<5x128xf32> to vector<1x5x128xf32>
    tpu.vector_store %arg3[%c0_23, %c0_24, %c0_25], %23 {strides = array<i32>} : memref<1x5x128xf32, #tpu.memory_space<vmem>>, vector<1x5x128xf32>,
    return
  }
  func.func @transform_0(%arg0: i32) -> (i32, i32, i32) {
    %c0_i32 = arith.constant 0 : i32
    %c0_i32_0 = arith.constant 0 : i32
    %c0_i32_1 = arith.constant 0 : i32
    return %arg0, %c0_i32, %c0_i32_0 : i32, i32, i32
  }
  func.func @transform_1(%arg0: i32) -> (i32, i32, i32) {
    %c0_i32 = arith.constant 0 : i32
    %c0_i32_0 = arith.constant 0 : i32
    %c0_i32_1 = arith.constant 0 : i32
    %c0_i32_2 = arith.constant 0 : i32
    return %c0_i32, %c0_i32_0, %c0_i32_1 : i32, i32, i32
  }
  func.func @transform_2(%arg0: i32) -> (i32, i32, i32) {
    %c0_i32 = arith.constant 0 : i32
    %c0_i32_0 = arith.constant 0 : i32
    %c0_i32_1 = arith.constant 0 : i32
    return %arg0, %c0_i32, %c0_i32_0 : i32, i32, i32
  }
}

</mosaic_0001>

<llo_original>
// kernel: tpu_custom_call.1
$region0: #{tpu_custom_call.1}
  #allocation0 [shape = 'u32[]', space=smem, size = 0x4, offset = 0x4, fixed_abs, tag = 'smem constant byte address 0x4 - core index']
  #allocation1 [shape = 'u32[144,128]{1,0:T(1,128)}', space=vmem, size = 0x12000, scoped, tag = 'internal scratch']
  #allocation2 [shape = 'f32[13,128]{1,0:T(8,128)}', space=vmem, size = 0x2000, scoped, tag = 'scratch operand']
  %s0 = inlined_call_operand.vmem [shape: bf16[2,10,32], index: 0, kind: input, shape index: {}]
  %s1 = inlined_call_operand.hbm [shape: bf16[2,32,128], index: 1, kind: input, shape index: {}]
  %s2 = inlined_call_operand.vmem [shape: f32[2,5,128], index: 2, kind: output, shape index: {}]
  %s3 = sld [smem:[#allocation0]]
  $region45: #{tpu_custom_call.1} parent=0
    _
  %s5 = ssub.s32 1, %s3
  %s6 = scalar_select 0, %s5, %s3
  $region1: #{tpu_custom_call.1} parent=0
    #allocation3 [shape = 'u8[16384]{0}', space=vmem, size = 0x4000, scoped, tag = 'input window, operand 1, single buffered']
    #allocation4 [shape = 's32[2]{0}', space=sflag, size = 0x8, scoped, tag = 'scoped memory for tpu_custom_call.1']
    %7 = vsyncpa [#allocation4], 0
    loop: start=0, step=1, limit=4
    $region2: #{tpu_custom_call.1} parent=1 // loop_pre_header
      _
    $region3: #{tpu_custom_call.1} parent=1 // loop_header
      %s9 = sphi 0, %s13
      %p10 = scmp.ge.s32.totalorder %s9, 4
      %s19 = sphi 0, %s21
      %s22 = sphi 0, %s19
      %s23 = sphi 0, %s22
      %s39 = sphi 0, %s23
      %s43 = sphi 0, %s43
      %s45 = sphi 0, %s43
      %s46 = sphi 0, %s45
      %s60 = sphi 0, %s46
      %s66 = sphi 0, %s68
      %s69 = sphi 0, %s66
      %s70 = sphi 0, %s69
      %s86 = sphi 0, %s70
    $region4: #{tpu_custom_call.1} parent=1 // loop_header_branch
      %12 = sbr.rel (%p10) target = $region8
    $region5: #{tpu_custom_call.1} parent=1 // loop_body
      %s14 = ssub.s32 %s9, 1
      %s15 = ssub.s32 %s9, 2
      %s16 = sadd.s32 %s9, 1
      %s17 = ssub.s32 %s9, %s16
      %p18 = scmp.eq.s32.totalorder %s17, 0
      %s20 = sadd.s32 %s19, 1
      %s21 = scalar_select %p18, %s19, %s20
      %p24 = pneg %p18
      %p25 = scmp.eq.s32.totalorder %s9, 1
      %p26 = por %p24, %p25
      %p27 = scmp.ne.s32.totalorder %s19, %s22
      %p28 = scmp.eq.s32.totalorder %s9, 0
      %p29 = por %p27, %p28
      %p30 = scmp.ne.s32.totalorder %s19, %s22
      %p31 = scmp.eq.s32.totalorder %s14, 1
      %p32 = por %p30, %p31
      %p33 = scmp.ne.s32.totalorder %s22, %s23
      %p34 = scmp.eq.s32.totalorder %s14, 0
      %p35 = por %p33, %p34
      %p36 = scmp.ne.s32.totalorder %s22, %s23
      %p37 = scmp.eq.s32.totalorder %s15, 1
      %p38 = por %p36, %p37
      %p40 = scmp.ne.s32.totalorder %s23, %s39
      %p41 = scmp.eq.s32.totalorder %s15, 0
      %p42 = por %p40, %p41
      %s44 = sadd.s32 %s43, 1
      %p47 = scmp.eq.s32.totalorder %s9, 1
      %p48 = scmp.ne.s32.totalorder %s43, %s45
      %p49 = scmp.eq.s32.totalorder %s9, 0
      %p50 = por %p48, %p49
      %p51 = scmp.ne.s32.totalorder %s43, %s45
      %p52 = scmp.eq.s32.totalorder %s14, 1
      %p53 = por %p51, %p52
      %p54 = scmp.ne.s32.totalorder %s45, %s46
      %p55 = scmp.eq.s32.totalorder %s14, 0
      %p56 = por %p54, %p55
      %p57 = scmp.ne.s32.totalorder %s45, %s46
      %p58 = scmp.eq.s32.totalorder %s15, 1
      %p59 = por %p57, %p58
      %p61 = scmp.ne.s32.totalorder %s46, %s60
      %p62 = scmp.eq.s32.totalorder %s15, 0
      %p63 = por %p61, %p62
      %s64 = ssub.s32 %s9, %s16
      %p65 = scmp.eq.s32.totalorder %s64, 0
      %s67 = sadd.s32 %s66, 1
      %s68 = scalar_select %p65, %s66, %s67
      %p71 = pneg %p65
      %p72 = scmp.eq.s32.totalorder %s9, 1
      %p73 = por %p71, %p72
      %p74 = scmp.ne.s32.totalorder %s66, %s69
      %p75 = scmp.eq.s32.totalorder %s9, 0
      %p76 = por %p74, %p75
      %p77 = scmp.ne.s32.totalorder %s66, %s69
      %p78 = scmp.eq.s32.totalorder %s14, 1
      %p79 = por %p77, %p78
      %p80 = scmp.ne.s32.totalorder %s69, %s70
      %p81 = scmp.eq.s32.totalorder %s14, 0
      %p82 = por %p80, %p81
      %p83 = scmp.ne.s32.totalorder %s69, %s70
      %p84 = scmp.eq.s32.totalorder %s15, 1
      %p85 = por %p83, %p84
      %p87 = scmp.ne.s32.totalorder %s70, %s86
      %p88 = scmp.eq.s32.totalorder %s15, 0
      %p89 = por %p87, %p88
      %p90 = scmp.le.s32.totalorder 1, %s9
      %p91 = scmp.lt.s32.totalorder %s9, 3
      %p92 = pnand %p90, %p91
      %p93 = pneg %p92
      // Predicated region
      $region9: #{tpu_custom_call.1} parent=5 // pred_check
        _
      $region10: #{tpu_custom_call.1} parent=5 // pred_check_branch
        %95 = sbr.rel (%p92) target = $region12
      $region11: #{tpu_custom_call.1} parent=5 // pred_region
        %s96 = ssub.s32 %s9, 1
        // Predicated region
        $region13: #{tpu_custom_call.1} parent=11 // pred_check
          %p97 = pneg %p56
        $region14: #{tpu_custom_call.1} parent=11 // pred_check_branch
          %99 = sbr.rel (%p97) target = $region16
        $region15: #{tpu_custom_call.1} parent=11 // pred_region
          %s101 = ssub.s32 512, 512
          %102 = vsyncadd [#allocation4], %s101
          %s103 = sshll.u32 [#allocation3], 4
          %s104 = int_to_ptr.vmem [resolvable:$true] %s103
          %109 = dma.hbm_to_vmem [thread:$0]  %s1, 512, %s104, [#allocation4], 64, 64, 4
        $region16: #{tpu_custom_call.1} parent=11 // pred_fallthru
          _
      $region12: #{tpu_custom_call.1} parent=5 // pred_fallthru
        _
      %p110 = scmp.lt.s32.totalorder %s9, 2
      // Predicated region
      $region17: #{tpu_custom_call.1} parent=5 // pred_check
        %p111 = pneg %p110
      $region18: #{tpu_custom_call.1} parent=5 // pred_check_branch
        %113 = sbr.rel (%p111) target = $region20
      $region19: #{tpu_custom_call.1} parent=5 // pred_region
        // Predicated region
        $region21: #{tpu_custom_call.1} parent=19 // pred_check
          %p114 = pneg %p29
        $region22: #{tpu_custom_call.1} parent=19 // pred_check_branch
          %116 = sbr.rel (%p114) target = $region24
        $region23: #{tpu_custom_call.1} parent=19 // pred_region
          %p117 = scmp.lt.s32.totalorder %s9, 1
          %s118 = scalar_select %p117, %s9, 1
          %s119 = smul.addr %s118, 2
          %s120 = smul.addr %s119, 4
          %s121 = scalar_lea.vmem %s0, %s120
        $region24: #{tpu_custom_call.1} parent=19 // pred_fallthru
          _
      $region20: #{tpu_custom_call.1} parent=5 // pred_fallthru
        _
      %p122 = scmp.le.s32.totalorder 1, %s9
      %p123 = scmp.lt.s32.totalorder %s9, 3
      %p124 = pnand %p122, %p123
      %p125 = pneg %p124
      // Predicated region
      $region25: #{tpu_custom_call.1} parent=5 // pred_check
        _
      $region26: #{tpu_custom_call.1} parent=5 // pred_check_branch
        %127 = sbr.rel (%p124) target = $region28
      $region27: #{tpu_custom_call.1} parent=5 // pred_region
        %s128 = ssub.s32 %s9, 1
        // Predicated region
        $region29: #{tpu_custom_call.1} parent=27 // pred_check
          %p129 = pneg %p56
        $region30: #{tpu_custom_call.1} parent=27 // pred_check_branch
          %131 = sbr.rel (%p129) target = $region32
        $region31: #{tpu_custom_call.1} parent=27 // pred_region
          %132 = dma.done [#allocation4], 512
        $region32: #{tpu_custom_call.1} parent=27 // pred_fallthru
          _
        %p133 = scmp.lt.s32.totalorder %s14, 1
        %s134 = scalar_select %p133, %s14, 1
        %s135 = smul.addr %s134, 2
        %s136 = smul.addr %s135, 4
        %s137 = scalar_lea.vmem %s0, %s136
        %p138 = pneg %p35
        %p139 = pneg %p32
        %p140 = pneg %p56
        %p141 = pneg %p53
        %p142 = pneg %p82
        %p143 = pneg %p79
        %p144 = scmp.lt.s32.totalorder %s14, 1
        %s145 = scalar_select %p144, %s14, 1
        %s146 = smul.addr %s145, 8
        %s147 = scalar_lea.vmem %s2, %s146
        %p148 = scmp.lt.s32.totalorder %s14, 1
        %s149 = scalar_select %p148, %s14, 1
        %s150 = smul.addr %s149, 2
        %s151 = smul.addr %s150, 4
        %s152 = scalar_lea.vmem %s0, %s151
        %p153 = scmp.lt.s32.totalorder %s14, 1
        %s154 = scalar_select %p153, %s14, 1
        %s155 = smul.addr %s154, 8
        %s156 = scalar_lea.vmem %s2, %s155
        %v158 = vld [vmem:[%s152] sm:$0xf]
        %v159 = vld [vmem:[%s152 + $0x4] sm:$0x1]
        %v160 = vld [vmem:[#allocation3] sm:$0xf]
        %v161 = vld [vmem:[#allocation3 + $0x4] sm:$0xf]
        %v162 = vld [vmem:[#allocation3 + $0x8] sm:$0xf]
        %v163 = vld [vmem:[#allocation3 + $0xc] sm:$0xf]
        %s164 = scalar_lea.vmem [#allocation3], 16
        %v165 = vld [vmem:[%s164] sm:$0xf]
        %v166 = vld [vmem:[%s164 + $0x4] sm:$0xf]
        %v167 = vld [vmem:[%s164 + $0x8] sm:$0xf]
        %v168 = vld [vmem:[%s164 + $0xc] sm:$0xf]
        %v171 = vunpack.c.l.b16 %v158
        %v172 = vunpack.c.l.b16 %v159
        %v173 = vpack.c.b16 %v172, %v171
        %v175 = vshrl.u32 %v173, 16
        %v177 = vshll.u32 %v173, 16
        %v179 = vrot.slane %v177, 1
        %v180 = vor.u32 %v175, %v179
        %v185 = vunpack.c.l.b16 %v165
        %v186 = vunpack.c.l.b16 %v166
        %v187 = vunpack.c.l.b16 %v167
        %v188 = vunpack.c.l.b16 %v168
        %v189 = vpack.c.b16 %v186, %v185
        %v190 = vpack.c.b16 %v188, %v187
        %vm193 = vcmask 261120
        %v195 = vsel %vm193, %v180, 0
        %197 = vmatprep.subr.bf16.mxu0 0
        %198 = vmatpush1.bf16.msra.mxu0 0
        %199 = vmatprep.subr.bf16.mxu0 0
        %200 = vmatpush1.bf16.msra.mxu0 0
        %201 = vmatprep.subr.bf16.mxu0 0
        %202 = vmatpush1.bf16.msra.mxu0 0
        %203 = vmatprep.subr.bf16.mxu0 0
        %204 = vmatpush1.bf16.msra.mxu0 0
        %205 = vmatprep.subr.bf16.mxu0 0
        %206 = vmatpush1.bf16.msra.mxu0 0
        %207 = vmatprep.subr.bf16.mxu0 0
        %208 = vmatpush1.bf16.msra.mxu0 0
        %209 = vmatprep.subr.bf16.mxu0 0
        %210 = vmatpush1.bf16.msra.mxu0 %v190
        %211 = vmatprep.subr.bf16.mxu0 0
        %212 = vmatpush1.bf16.msra.mxu0 %v189
        %213 = vmatprep.subr.bf16.mxu0 0
        %214 = vmatpush2.bf16.msra.mxu0 0
        %215 = vmatprep.subr.bf16.mxu0 0
        %216 = vmatpush2.bf16.msra.mxu0 0
        %217 = vmatprep.subr.bf16.mxu0 0
        %218 = vmatpush2.bf16.msra.mxu0 0
        %219 = vmatprep.subr.bf16.mxu0 0
        %220 = vmatpush2.bf16.msra.mxu0 0
        %221 = vmatprep.subr.bf16.mxu0 0
        %222 = vmatpush2.bf16.msra.mxu0 0
        %223 = vmatprep.subr.bf16.mxu0 0
        %224 = vmatpush2.bf16.msra.mxu0 0
        %225 = vmatprep.subr.bf16.mxu0 0
        %226 = vmatpush2.bf16.msra.mxu0 0
        %227 = vmatprep.subr.bf16.mxu0 0
        %228 = vmatpush2.bf16.msra.mxu0 0
        %229 = vmatprep.mubr.bf16.mxu0 0
        %230 = vmatmul.mubr.bf16.gmra.mxu0 %v195
        %v231 = vpop.f32.mrf.mxu0
        %v232 = vadd.f32 0.0, %v231
        %v233 = vpop.f32.mrf.mxu0
        %v234 = vpop.f32.mrf.mxu0
        %v235 = vadd.f32 0.0, %v234
        %v236 = vpop.f32.mrf.mxu0
        %237 = vdwg.mxu0
        %v242 = vunpack.c.l.b16 %v160
        %v243 = vunpack.c.l.b16 %v161
        %v244 = vunpack.c.l.b16 %v162
        %v245 = vunpack.c.l.b16 %v163
        %v246 = vpack.c.b16 %v243, %v242
        %v247 = vpack.c.b16 %v245, %v244
        %v250 = vsel %vm193, %v173, 0
        %252 = vmatprep.subr.bf16.mxu0 0
        %253 = vmatpush1.bf16.msra.mxu0 0
        %254 = vmatprep.subr.bf16.mxu0 0
        %255 = vmatpush1.bf16.msra.mxu0 0
        %256 = vmatprep.subr.bf16.mxu0 0
        %257 = vmatpush1.bf16.msra.mxu0 0
        %258 = vmatprep.subr.bf16.mxu0 0
        %259 = vmatpush1.bf16.msra.mxu0 0
        %260 = vmatprep.subr.bf16.mxu0 0
        %261 = vmatpush1.bf16.msra.mxu0 0
        %262 = vmatprep.subr.bf16.mxu0 0
        %263 = vmatpush1.bf16.msra.mxu0 0
        %264 = vmatprep.subr.bf16.mxu0 0
        %265 = vmatpush1.bf16.msra.mxu0 %v247
        %266 = vmatprep.subr.bf16.mxu0 0
        %267 = vmatpush1.bf16.msra.mxu0 %v246
        %268 = vmatprep.subr.bf16.mxu0 0
        %269 = vmatpush2.bf16.msra.mxu0 0
        %270 = vmatprep.subr.bf16.mxu0 0
        %271 = vmatpush2.bf16.msra.mxu0 0
        %272 = vmatprep.subr.bf16.mxu0 0
        %273 = vmatpush2.bf16.msra.mxu0 0
        %274 = vmatprep.subr.bf16.mxu0 0
        %275 = vmatpush2.bf16.msra.mxu0 0
        %276 = vmatprep.subr.bf16.mxu0 0
        %277 = vmatpush2.bf16.msra.mxu0 0
        %278 = vmatprep.subr.bf16.mxu0 0
        %279 = vmatpush2.bf16.msra.mxu0 0
        %280 = vmatprep.subr.bf16.mxu0 0
        %281 = vmatpush2.bf16.msra.mxu0 0
        %282 = vmatprep.subr.bf16.mxu0 0
        %283 = vmatpush2.bf16.msra.mxu0 0
        %284 = vmatprep.mubr.bf16.mxu0 0
        %285 = vmatmul.mubr.bf16.gmra.mxu0 %v250
        %v286 = vpop.f32.mrf.mxu0
        %v287 = vadd.f32 %v232, %v286
        %v288 = vpop.f32.mrf.mxu0
        %v289 = vpop.f32.mrf.mxu0
        %v290 = vadd.f32 %v235, %v289
        %v291 = vpop.f32.mrf.mxu0
        %292 = vdwg.mxu0
        %293 = vst [vmem:[#allocation2] sm:$0x1] -inf
        %294 = vst [vmem:[#allocation2 + $0xa] sm:$0x7] -inf
        %295 = vst [vmem:[#allocation2 + $0x1] sm:$0xff] %v287
        %296 = vst [vmem:[#allocation2 + $0x9] sm:$0x1] %v290
        %v297 = vld [vmem:[#allocation2] ss:$2 sm:$0x1f]
        %s298 = scalar_lea.vmem [#allocation2], 1
        %v299 = vld [vmem:[%s298] ss:$2 sm:$0x1f]
        %v300 = vmax.f32 %v297, %v299
        %s301 = scalar_lea.vmem [#allocation2], 2
        %v302 = vld [vmem:[%s301] ss:$2 sm:$0x1f]
        %v303 = vmax.f32 %v300, %v302
        %304 = vst [vmem:[%s156] sm:$0x1f] %v303
        %p305 = scmp.lt.s32.totalorder %s14, 1
        %s306 = scalar_select %p305, %s14, 1
        %s307 = smul.addr %s306, 8
        %s308 = scalar_lea.vmem %s2, %s307
        // Predicated region
        $region33: #{tpu_custom_call.1} parent=27 // pred_check
          %p309 = pneg %p79
        $region34: #{tpu_custom_call.1} parent=27 // pred_check_branch
          %311 = sbr.rel (%p309) target = $region36
        $region35: #{tpu_custom_call.1} parent=27 // pred_region
          _
        $region36: #{tpu_custom_call.1} parent=27 // pred_fallthru
          _
      $region28: #{tpu_custom_call.1} parent=5 // pred_fallthru
        _
      %p312 = scmp.le.s32.totalorder 2, %s9
      // Predicated region
      $region37: #{tpu_custom_call.1} parent=5 // pred_check
        %p313 = pneg %p312
      $region38: #{tpu_custom_call.1} parent=5 // pred_check_branch
        %315 = sbr.rel (%p313) target = $region40
      $region39: #{tpu_custom_call.1} parent=5 // pred_region
        %s316 = ssub.s32 %s9, 2
        // Predicated region
        $region41: #{tpu_custom_call.1} parent=39 // pred_check
          %p317 = pneg %p85
        $region42: #{tpu_custom_call.1} parent=39 // pred_check_branch
          %319 = sbr.rel (%p317) target = $region44
        $region43: #{tpu_custom_call.1} parent=39 // pred_region
          %p320 = scmp.lt.s32.totalorder %s15, 1
          %s321 = scalar_select %p320, %s15, 1
          %s322 = smul.addr %s321, 8
          %s323 = scalar_lea.vmem %s2, %s322
        $region44: #{tpu_custom_call.1} parent=39 // pred_fallthru
          _
      $region40: #{tpu_custom_call.1} parent=5 // pred_fallthru
        _
    $region6: #{tpu_custom_call.1} parent=1 // loop_footer
      %s13 = sadd.s32 1, %s9
    $region7: #{tpu_custom_call.1} parent=1 // loop_footer_branch
      %8 = sbr.rel target = $region3
    $region8: #{tpu_custom_call.1} parent=1 // loop_exit
      _
    %324 = vsyncpa [#allocation4], 1
    %s325 = scalar_lea.sflag [#allocation4], 1
    %326 = vsyncpa %s325, 1

</llo_original>
